<compile_context>
chip_gen: v5e
topology: v5e:2x2
jax: 0.10.0
libtpu: 0.0.40
codegen_flags: <defaults>
</compile_context>

<pallas_src>
import math
import functools

import jax
import jax.numpy as jnp
from jax import lax
from jax.experimental import pallas as pl
from jax.experimental.pallas import tpu as pltpu


# Large finite negative instead of -inf: identical softmax whenever a row has a
# visible key, and no NaN propagation if a row is fully masked.
_MASK_NEG = -1e30


def _tpu_generation():
    """Best-effort TPU generation (5 / 6 / 7) from the device-kind string."""
    try:
        kind = jax.devices()[0].device_kind.lower()
    except Exception:
        return 6
    if "v7" in kind:
        return 7
    if "v6" in kind:
        return 6
    if "v5" in kind or "v4" in kind or "v3" in kind or "v2" in kind:
        # No bf16 EUP/VPU -> keep softmax math in f32 (VMEM is large on these).
        return 5
    return 6


def _softmax_and_outputs(scores, v, o_ref, a_ref, exp_dtype):
    """Row softmax of f32 `scores`, write attention and attention @ V."""
    m = jnp.max(scores, axis=-1, keepdims=True)
    e = jnp.exp((scores - m).astype(exp_dtype))                    # EUP (bf16 on v6e/v7x)
    denom = jnp.sum(e, axis=-1, keepdims=True, dtype=jnp.float32)  # always f32 accumulation
    inv = pl.reciprocal(denom, approx=True)                        # EUP slot, nearly free
    attn = e * inv.astype(exp_dtype)

    a_ref[...] = attn.astype(a_ref.dtype)

    ctx = lax.dot_general(
        attn.astype(v.dtype), v,                                   # bf16 into the MXU
        dimension_numbers=(((2,), (1,)), ((0,), (0,))),
        preferred_element_type=jnp.float32,
    )
    o_ref[...] = ctx.astype(o_ref.dtype)


def _sdpa_kernel(q_ref, k_ref, v_ref, o_ref, a_ref, *, scale, exp_dtype):
    # Blocks: q (bb, tq, D), k/v (bb, Sk, D), o (bb, tq, D), a (bb, tq, Sk).
    q = q_ref[...]
    q = q * jnp.asarray(scale, q.dtype)          # fold 1/sqrt(D) into q (D muls, not Sk)
    scores = lax.dot_general(
        q, k_ref[...],
        dimension_numbers=(((2,), (2,)), ((0,), (0,))),
        preferred_element_type=jnp.float32,
    )
    _softmax_and_outputs(scores, v_ref[...], o_ref, a_ref, exp_dtype)


def _sdpa_masked_kernel(q_ref, k_ref, v_ref, m_ref, o_ref, a_ref, *, scale, exp_dtype):
    q = q_ref[...]
    q = q * jnp.asarray(scale, q.dtype)
    scores = lax.dot_general(
        q, k_ref[...],
        dimension_numbers=(((2,), (2,)), ((0,), (0,))),
        preferred_element_type=jnp.float32,
    )
    # In-kernel masking: pure VPU compare+select sitting under MXU slack.  The
    # mask block may broadcast over any of (head-pack, Sq, Sk) dims.
    scores = jnp.where(m_ref[...] == 0, jnp.float32(_MASK_NEG), scores)
    _softmax_and_outputs(scores, v_ref[...], o_ref, a_ref, exp_dtype)


def _select_tiles(B, Sq, Sk, D, itemsize, has_mask, gen):
    """Pick (heads-per-step bb, Sq tile tq) under a generation-aware VMEM budget."""
    if gen >= 7:
        budget = 20 * 1024 * 1024      # v7x: 64 MiB VMEM per TC -> stay conservative
        tq_cap = 512
    else:
        budget = 48 * 1024 * 1024      # v5e/v6e: 128 MiB VMEM -> bigger tiles, fewer steps
        tq_cap = 1024

    def step_bytes(bb, tq):
        inp = bb * (tq * D + 2 * Sk * D) * itemsize
        if has_mask:
            inp += bb * tq * Sk * 4                # conservative (mask often far smaller)
        out = bb * (tq * D + tq * Sk) * itemsize
        live = bb * tq * Sk * 4 * 2                # f32 scores + exp intermediates
        return 2 * (inp + out) + live              # x2: double-buffered pipeline

    # Sq tile: biggest of {Sq, 1024, 512, 256, 128} (<= cap) that fits the budget.
    tq = Sq
    if tq > tq_cap or step_bytes(1, tq) > budget:
        tq = min(Sq, 128)
        for cand in (1024, 512, 256, 128):
            if cand <= tq_cap and cand <= Sq and step_bytes(1, cand) <= budget:
                tq = cand
                break
    # TODO(synk): add an Sk-tiling (flash-style running max/sum) fallback when
    # 2*Sk*D resident K/V plus the (tq,Sk) f32 score block cannot fit the budget
    # even at tq=128; currently only tq shrinks.

    # Pack several (batch, head) slices per step only when one head is tiny:
    # amortizes per-step overhead and widens the DMAs / stores.
    bb = 1
    if Sq * Sk < 128 * 128:
        for cand in range(min(B, 32), 0, -1):
            if B % cand != 0 or step_bytes(cand, tq) > budget:
                continue
            # On v7x keep >= 2 head-blocks so both TensorCores get work.
            if gen >= 7 and B >= 2 and (B // cand) < 2:
                continue
            bb = cand
            break
    return bb, tq


def scaled_dot_product_attention(query, key, value, mask=None):
    """Pallas implementation of ScaledDotProductAttention.forward.

    query: [..., Sq, D], key/value: [..., Sk, D], mask (optional): broadcastable
    to [..., Sq, Sk].  Returns (context [..., Sq, D], attention [..., Sq, Sk]).
    """
    *lead, Sq, D = query.shape
    Sk = key.shape[-2]
    B = 1
    for d in lead:
        B *= d
    B = max(B, 1)

    qf = query.reshape(B, Sq, D)
    kf = key.reshape(B, Sk, D)
    vf = value.reshape(B, Sk, D)

    gen = _tpu_generation()
    scale = 1.0 / math.sqrt(D)
    has_mask = mask is not None
    # bf16 exp only where the EUP is bf16-capable AND the visible attention is
    # bf16 anyway (keeps strict f32 parity for f32 inputs, and f32 math on v5e).
    use_bf16_exp = gen >= 6 and qf.dtype == jnp.bfloat16
    exp_dtype = jnp.bfloat16 if use_bf16_exp else jnp.float32

    bb, tq = _select_tiles(B, Sq, Sk, D, qf.dtype.itemsize, has_mask, gen)
    grid = (B // bb, pl.cdiv(Sq, tq))

    in_specs = [
        pl.BlockSpec((bb, tq, D), lambda b, qi: (b, qi, 0)),
        pl.BlockSpec((bb, Sk, D), lambda b, qi: (b, 0, 0)),   # K resident across Sq tiles
        pl.BlockSpec((bb, Sk, D), lambda b, qi: (b, 0, 0)),   # V resident across Sq tiles
    ]
    out_shapes = (
        jax.ShapeDtypeStruct((B, Sq, D), query.dtype),
        jax.ShapeDtypeStruct((B, Sq, Sk), query.dtype),       # attn in input dtype
    )
    out_specs = (
        pl.BlockSpec((bb, tq, D), lambda b, qi: (b, qi, 0)),
        # TODO(synk): for tiny heads (Sk < 128, bb > 1) pack the bb heads onto the
        # lane axis (write a (tq, bb*Sk) slab) to turn masked vst.msk partial stores
        # into full-width stores; needs an in-kernel transpose + wrapper un-shuffle.
        pl.BlockSpec((bb, tq, Sk), lambda b, qi: (b, qi, 0)),
    )

    mask_bytes = 0
    if has_mask:
        # Feed the mask in (nearly) its original shape -- no [B,Sq,Sk] bias
        # materialization in HBM.  Broadcast dims are handled by a constant
        # block index in the index_map plus in-kernel jnp.where broadcasting.
        m = mask
        if m.dtype == jnp.bool_:
            m = m.astype(jnp.int32)
        nd = len(lead) + 2
        if m.ndim < nd:
            m = m.reshape((1,) * (nd - m.ndim) + m.shape)
        mlead, (mSq, mSk) = m.shape[:-2], m.shape[-2:]
        if mSq not in (1, Sq) or mSk not in (1, Sk):
            raise ValueError(f"mask shape {mask.shape} is not broadcastable to scores")
        if all(d == 1 for d in mlead):
            Bm = 1
            mf = m.reshape(1, mSq, mSk)
        else:
            # TODO(synk): for masks broadcast over only SOME leading dims, decompose
            # the flattened head index inside the index_map instead of broadcasting
            # the (cheap) leading dims here.
            if tuple(mlead) != tuple(lead):
                m = jnp.broadcast_to(m, tuple(lead) + (mSq, mSk))
            Bm = B
            mf = m.reshape(B, mSq, mSk)

        mbb = bb if Bm == B else 1
        mtq = tq if mSq == Sq else 1
        if Bm == B and mSq == Sq:
            mmap = lambda b, qi: (b, qi, 0)
        elif Bm == B:
            mmap = lambda b, qi: (b, 0, 0)
        elif mSq == Sq:
            mmap = lambda b, qi: (0, qi, 0)
        else:
            mmap = lambda b, qi: (0, 0, 0)
        in_specs = in_specs + [pl.BlockSpec((mbb, mtq, mSk), mmap)]
        kernel = functools.partial(_sdpa_masked_kernel, scale=scale, exp_dtype=exp_dtype)
        args = (qf, kf, vf, mf)
        mask_bytes = mf.size * mf.dtype.itemsize
    else:
        kernel = functools.partial(_sdpa_kernel, scale=scale, exp_dtype=exp_dtype)
        args = (qf, kf, vf)

    itemsize = qf.dtype.itemsize
    cost = pl.CostEstimate(
        flops=4 * B * Sq * Sk * D,
        transcendentals=B * Sq * Sk,
        bytes_accessed=(qf.size + kf.size + vf.size + B * Sq * D + B * Sq * Sk) * itemsize
        + mask_bytes,
    )

    cparams = pltpu.CompilerParams(
        # Head axis parallel, Sq-tile axis arbitrary: on v7x only the head axis
        # is sharded across the 2 TensorCores, preserving K/V residency per core.
        dimension_semantics=("parallel", "arbitrary"),
        vmem_limit_bytes=(48 if gen >= 7 else 96) * 1024 * 1024,
    )

    ctx, attn = pl.pallas_call(
        kernel,
        out_shape=out_shapes,
        grid_spec=pltpu.PrefetchScalarGridSpec(
            num_scalar_prefetch=0,
            grid=grid,
            in_specs=in_specs,
            out_specs=out_specs,
        ),
        compiler_params=cparams,
        cost_estimate=cost,
    )(*args)

    ctx = ctx.reshape(*lead, Sq, D)
    attn = attn.reshape(*lead, Sq, Sk)
    return ctx, attn


def _reference(query, key, value, mask=None):
    q32 = query.astype(jnp.float32)
    k32 = key.astype(jnp.float32)
    v32 = value.astype(jnp.float32)
    scores = jnp.einsum("...qd,...kd->...qk", q32, k32) / math.sqrt(query.shape[-1])
    if mask is not None:
        scores = jnp.where(mask == 0, -jnp.inf, scores)
    attn = jax.nn.softmax(scores, axis=-1)
    ctx = jnp.einsum("...qk,...kd->...qd", attn, v32)
    return ctx, attn


if __name__ == "__main__":
    key0 = jax.random.PRNGKey(0)
    kq, kk, kv, km, kq2, kk2, kv2 = jax.random.split(key0, 7)

    # --- Small f32 case (tiny heads get packed into few grid steps). ---
    B, H, Sq, Sk, D = 2, 2, 8, 8, 32
    q = jax.random.normal(kq, (B, H, Sq, D), dtype=jnp.float32)
    k = jax.random.normal(kk, (B, H, Sk, D), dtype=jnp.float32)
    v = jax.random.normal(kv, (B, H, Sk, D), dtype=jnp.float32)

    ctx, attn = scaled_dot_product_attention(q, k, v)
    jax.block_until_ready((ctx, attn))
    ctx_ref, attn_ref = _reference(q, k, v)
    # Tolerance accounts for the EUP approximate reciprocal in the softmax.
    assert jnp.allclose(ctx, ctx_ref, atol=1e-2, rtol=1e-2)
    assert jnp.allclose(attn, attn_ref, atol=1e-2, rtol=1e-2)

    # Full per-head mask [B, H, Sq, Sk] (at least one visible key per row).
    mask = jax.random.bernoulli(km, 0.7, (B, H, Sq, Sk)).astype(jnp.int32)
    mask = mask.at[..., 0].set(1)
    ctx_m, attn_m = scaled_dot_product_attention(q, k, v, mask=mask)
    jax.block_until_ready((ctx_m, attn_m))
    ctx_mref, attn_mref = _reference(q, k, v, mask=mask)
    assert jnp.allclose(ctx_m, ctx_mref, atol=1e-2, rtol=1e-2)
    assert jnp.allclose(attn_m, attn_mref, atol=1e-2, rtol=1e-2)

    # Broadcast mask [1, 1, Sq, Sk] -- exercised entirely in-kernel (no HBM bias).
    mask_b = mask[:1, :1]
    ctx_b, attn_b = scaled_dot_product_attention(q, k, v, mask=mask_b)
    jax.block_until_ready((ctx_b, attn_b))
    ctx_bref, attn_bref = _reference(q, k, v, mask=mask_b)
    assert jnp.allclose(ctx_b, ctx_bref, atol=1e-2, rtol=1e-2)
    assert jnp.allclose(attn_b, attn_bref, atol=1e-2, rtol=1e-2)

    # Key-padding style mask [B, 1, 1, Sk] -- broadcasts over heads and Sq.
    mask_kp = jax.random.bernoulli(km, 0.6, (B, 1, 1, Sk)).astype(jnp.int32)
    mask_kp = mask_kp.at[..., 0].set(1)
    ctx_kp, attn_kp = scaled_dot_product_attention(q, k, v, mask=mask_kp)
    jax.block_until_ready((ctx_kp, attn_kp))
    ctx_kpref, attn_kpref = _reference(q, k, v, mask=mask_kp)
    assert jnp.allclose(ctx_kp, ctx_kpref, atol=1e-2, rtol=1e-2)
    assert jnp.allclose(attn_kp, attn_kpref, atol=1e-2, rtol=1e-2)

    # --- bf16 case large enough to exercise the Sq-tiling / bf16-exp path. ---
    B2, H2, S2, D2 = 1, 2, 1024, 128
    q2 = jax.random.normal(kq2, (B2, H2, S2, D2), dtype=jnp.float32).astype(jnp.bfloat16)
    k2 = jax.random.normal(kk2, (B2, H2, S2, D2), dtype=jnp.float32).astype(jnp.bfloat16)
    v2 = jax.random.normal(kv2, (B2, H2, S2, D2), dtype=jnp.float32).astype(jnp.bfloat16)
    ctx2, attn2 = scaled_dot_product_attention(q2, k2, v2)
    jax.block_until_ready((ctx2, attn2))
    ctx2_ref, attn2_ref = _reference(q2, k2, v2)
    assert jnp.allclose(ctx2.astype(jnp.float32), ctx2_ref, atol=3e-2, rtol=3e-2)
    assert jnp.allclose(attn2.astype(jnp.float32), attn2_ref, atol=3e-2, rtol=3e-2)

    print("KERNEL_OK")
</pallas_src>

<mosaic_0001>
module attributes {stable_mosaic.version = 11 : i64} {
  func.func @_sdpa_kernel(%arg0: i32, %arg1: i32, %arg2: memref<4x8x32xf32, #tpu.memory_space<vmem>>, %arg3: memref<4x8x32xf32, #tpu.memory_space<vmem>>, %arg4: memref<4x8x32xf32, #tpu.memory_space<vmem>>, %arg5: memref<4x8x32xf32, #tpu.memory_space<vmem>>, %arg6: memref<4x8x8xf32, #tpu.memory_space<vmem>>) attributes {dimension_semantics = [#tpu.dimension_semantics<parallel>, #tpu.dimension_semantics<arbitrary>], iteration_bounds = array<i64: 1, 1>, scalar_prefetch = 0 : i64, scratch_operands = 0 : i64, tpu.core_type = #tpu.core_type<tc>, window_params = [{transform_indices = @transform_0, window_bounds = array<i64: 4, 8, 32>}, {transform_indices = @transform_1, window_bounds = array<i64: 4, 8, 32>}, {transform_indices = @transform_2, window_bounds = array<i64: 4, 8, 32>}, {transform_indices = @transform_3, window_bounds = array<i64: 4, 8, 32>}, {transform_indices = @transform_4, window_bounds = array<i64: 4, 8, 8>}]} {
    %c0 = arith.constant 0 : index
    %c0_0 = arith.constant 0 : index
    %c0_1 = arith.constant 0 : index
    %0 = vector.load %arg2[%c0, %c0_0, %c0_1] : memref<4x8x32xf32, #tpu.memory_space<vmem>>, vector<4x8x32xf32>
    %cst = arith.constant 0.176776692 : f32
    %1 = vector.broadcast %cst : f32 to vector<4x8x32xf32>
    %2 = arith.mulf %0, %1 : vector<4x8x32xf32>
    %c0_2 = arith.constant 0 : index
    %c0_3 = arith.constant 0 : index
    %c0_4 = arith.constant 0 : index
    %3 = vector.load %arg3[%c0_2, %c0_3, %c0_4] : memref<4x8x32xf32, #tpu.memory_space<vmem>>, vector<4x8x32xf32>
    %cst_5 = arith.constant dense<0.000000e+00> : vector<4x8x8xf32>
    %4 = tpu.matmul %2, %3, %cst_5 {dimension_numbers = #tpu.dot_dimension_numbers<[2], [2], [1], [1], [0, 0, 0, 1, 1, 1], [0], [0]>} : vector<4x8x32xf32>, vector<4x8x32xf32>, vector<4x8x8xf32> -> vector<4x8x8xf32>
    %c0_6 = arith.constant 0 : index
    %c0_7 = arith.constant 0 : index
    %c0_8 = arith.constant 0 : index
    %5 = vector.load %arg4[%c0_6, %c0_7, %c0_8] : memref<4x8x32xf32, #tpu.memory_space<vmem>>, vector<4x8x32xf32>
    %cst_9 = arith.constant dense<0xFF800000> : vector<4x8xf32>
    %6 = vector.multi_reduction <maximumf>, %4, %cst_9 [2] : vector<4x8x8xf32> to vector<4x8xf32>
    %7 = vector.shape_cast %6 : vector<4x8xf32> to vector<4x8x1xf32>
    %8 = vector.broadcast %7 : vector<4x8x1xf32> to vector<4x8x8xf32>
    %9 = arith.subf %4, %8 : vector<4x8x8xf32>
    %10 = math.exp %9 : vector<4x8x8xf32>
    %cst_10 = arith.constant dense<0.000000e+00> : vector<4x8xf32>
    %11 = vector.multi_reduction <add>, %10, %cst_10 [2] : vector<4x8x8xf32> to vector<4x8xf32>
    %12 = vector.shape_cast %11 : vector<4x8xf32> to vector<4x8x1xf32>
    %13 = tpu.reciprocal %12 {approx = true} : vector<4x8x1xf32> -> vector<4x8x1xf32>
    %14 = vector.broadcast %13 : vector<4x8x1xf32> to vector<4x8x8xf32>
    %15 = arith.mulf %10, %14 : vector<4x8x8xf32>
    %c0_11 = arith.constant 0 : index
    %c0_12 = arith.constant 0 : index
    %c0_13 = arith.constant 0 : index
    %16 = vector.load %arg6[%c0_11, %c0_12, %c0_13] : memref<4x8x8xf32, #tpu.memory_space<vmem>>, vector<4x8x8xf32>
    tpu.vector_store %arg6[%c0_11, %c0_12, %c0_13], %15 {strides = array<i32>} : memref<4x8x8xf32, #tpu.memory_space<vmem>>, vector<4x8x8xf32>,
    %cst_14 = arith.constant dense<0.000000e+00> : vector<4x8x32xf32>
    %17 = tpu.matmul %15, %5, %cst_14 {dimension_numbers = #tpu.dot_dimension_numbers<[2], [1], [1], [2], [0, 0, 0, 1, 1, 2], [0], [0]>} : vector<4x8x8xf32>, vector<4x8x32xf32>, vector<4x8x32xf32> -> vector<4x8x32xf32>
    %c0_15 = arith.constant 0 : index
    %c0_16 = arith.constant 0 : index
    %c0_17 = arith.constant 0 : index
    %18 = vector.load %arg5[%c0_15, %c0_16, %c0_17] : memref<4x8x32xf32, #tpu.memory_space<vmem>>, vector<4x8x32xf32>
    tpu.vector_store %arg5[%c0_15, %c0_16, %c0_17], %17 {strides = array<i32>} : memref<4x8x32xf32, #tpu.memory_space<vmem>>, vector<4x8x32xf32>,
    return
  }
  func.func @transform_0(%arg0: i32, %arg1: i32) -> (i32, i32, i32) {
    %c0_i32 = arith.constant 0 : i32
    %c0_i32_0 = arith.constant 0 : i32
    return %arg0, %arg1, %c0_i32 : i32, i32, i32
  }
  func.func @transform_1(%arg0: i32, %arg1: i32) -> (i32, i32, i32) {
    %c0_i32 = arith.constant 0 : i32
    %c0_i32_0 = arith.constant 0 : i32
    %c0_i32_1 = arith.constant 0 : i32
    return %arg0, %c0_i32, %c0_i32_0 : i32, i32, i32
  }
  func.func @transform_2(%arg0: i32, %arg1: i32) -> (i32, i32, i32) {
    %c0_i32 = arith.constant 0 : i32
    %c0_i32_0 = arith.constant 0 : i32
    %c0_i32_1 = arith.constant 0 : i32
    return %arg0, %c0_i32, %c0_i32_0 : i32, i32, i32
  }
  func.func @transform_3(%arg0: i32, %arg1: i32) -> (i32, i32, i32) {
    %c0_i32 = arith.constant 0 : i32
    %c0_i32_0 = arith.constant 0 : i32
    return %arg0, %arg1, %c0_i32 : i32, i32, i32
  }
  func.func @transform_4(%arg0: i32, %arg1: i32) -> (i32, i32, i32) {
    %c0_i32 = arith.constant 0 : i32
    %c0_i32_0 = arith.constant 0 : i32
    return %arg0, %arg1, %c0_i32 : i32, i32, i32
  }
}

</mosaic_0001>

<llo_original>
// kernel: tpu_custom_call.1
$region0: #{tpu_custom_call.1}
  #allocation0 [shape = 'u32[]', space=smem, size = 0x4, offset = 0x4, fixed_abs, tag = 'smem constant byte address 0x4 - core index']
  #allocation1 [shape = 'u32[72,128]{1,0:T(1,128)}', space=vmem, size = 0x9000, scoped, tag = 'internal scratch']
  %s0 = inlined_call_operand.hbm [shape: f32[4,8,32], index: 0, kind: input, shape index: {}]
  %s1 = inlined_call_operand.hbm [shape: f32[4,8,32], index: 1, kind: input, shape index: {}]
  %s2 = inlined_call_operand.hbm [shape: f32[4,8,32], index: 2, kind: input, shape index: {}]
  %s3 = inlined_call_operand.hbm [shape: f32[4,8,32], index: 3, kind: output, shape index: {0}]
  %s4 = inlined_call_operand.hbm [shape: f32[4,8,8], index: 4, kind: output, shape index: {1}]
  %5 = xla_tuple %s3, %s4
  %s6 = sld [smem:[#allocation0]]
  $region42: #{tpu_custom_call.1} parent=0
    _
  %s8 = ssub.s32 1, %s6
  %s9 = scalar_select 0, %s8, %s6
  $region1: #{tpu_custom_call.1} parent=0
    #allocation2 [shape = 'u8[16384]{0}', space=vmem, size = 0x4000, scoped, tag = 'input window, operand 0, single buffered']
    #allocation3 [shape = 's32[1]{0}', space=sflag, size = 0x4, scoped, tag = 'scoped memory for tpu_custom_call.1']
    #allocation4 [shape = 's32[1]{0}', space=sflag, size = 0x4, scoped, tag = 'scoped memory for tpu_custom_call.1']
    #allocation5 [shape = 'u8[16384]{0}', space=vmem, size = 0x4000, scoped, tag = 'input window, operand 1, single buffered']
    #allocation6 [shape = 's32[1]{0}', space=sflag, size = 0x4, scoped, tag = 'scoped memory for tpu_custom_call.1']
    #allocation7 [shape = 'u8[16384]{0}', space=vmem, size = 0x4000, scoped, tag = 'input window, operand 2, single buffered']
    #allocation8 [shape = 'u8[16384]{0}', space=vmem, size = 0x4000, scoped, tag = 'output window, operand 0, single buffered']
    #allocation9 [shape = 'u8[16384]{0}', space=vmem, size = 0x4000, scoped, tag = 'output window, operand 1, single buffered']
    #allocation10 [shape = 's32[1]{0}', space=sflag, size = 0x4, scoped, tag = 'scoped memory for tpu_custom_call.1']
    %10 = vsyncpa [#allocation3], 0
    %11 = vsyncpa [#allocation6], 0
    %12 = vsyncpa [#allocation4], 0
    %13 = vsyncpa [#allocation10], 0
    // Predicated region
    $region2: #{tpu_custom_call.1} parent=1 // pred_check
      _
    $region3: #{tpu_custom_call.1} parent=1 // pred_check_branch
      %15 = sbr.rel (0) target = $region5
    $region4: #{tpu_custom_call.1} parent=1 // pred_region
      %17 = vsyncadd [#allocation3], 0
      %s18 = sshll.u32 %s0, 4
      %s19 = int_to_ptr.hbm [resolvable:$true] %s18
      %s20 = sshll.u32 [#allocation2], 4
      %s21 = int_to_ptr.vmem [resolvable:$true] %s20
      %26 = dma.hbm_to_vmem [thread:$0]  %s19, 512, %s21, [#allocation3], 128, 128, 8
    $region5: #{tpu_custom_call.1} parent=1 // pred_fallthru
      _
    // Predicated region
    $region6: #{tpu_custom_call.1} parent=1 // pred_check
      _
    $region7: #{tpu_custom_call.1} parent=1 // pred_check_branch
      %28 = sbr.rel (0) target = $region9
    $region8: #{tpu_custom_call.1} parent=1 // pred_region
      %30 = vsyncadd [#allocation6], 0
      %s31 = sshll.u32 %s1, 4
      %s32 = int_to_ptr.hbm [resolvable:$true] %s31
      %s33 = sshll.u32 [#allocation5], 4
      %s34 = int_to_ptr.vmem [resolvable:$true] %s33
      %39 = dma.hbm_to_vmem [thread:$0]  %s32, 512, %s34, [#allocation6], 128, 128, 8
    $region9: #{tpu_custom_call.1} parent=1 // pred_fallthru
      _
    // Predicated region
    $region10: #{tpu_custom_call.1} parent=1 // pred_check
      _
    $region11: #{tpu_custom_call.1} parent=1 // pred_check_branch
      %41 = sbr.rel (0) target = $region13
    $region12: #{tpu_custom_call.1} parent=1 // pred_region
      %43 = vsyncadd [#allocation6], 0
      %s44 = sshll.u32 %s2, 4
      %s45 = int_to_ptr.hbm [resolvable:$true] %s44
      %s46 = sshll.u32 [#allocation7], 4
      %s47 = int_to_ptr.vmem [resolvable:$true] %s46
      %52 = dma.hbm_to_vmem [thread:$0]  %s45, 512, %s47, [#allocation6], 128, 128, 8
    $region13: #{tpu_custom_call.1} parent=1 // pred_fallthru
      _
    // Predicated region
    $region14: #{tpu_custom_call.1} parent=1 // pred_check
      _
    $region15: #{tpu_custom_call.1} parent=1 // pred_check_branch
      %54 = sbr.rel (0) target = $region17
    $region16: #{tpu_custom_call.1} parent=1 // pred_region
      %56 = dma.done [#allocation3], 512
    $region17: #{tpu_custom_call.1} parent=1 // pred_fallthru
      _
    // Predicated region
    $region18: #{tpu_custom_call.1} parent=1 // pred_check
      _
    $region19: #{tpu_custom_call.1} parent=1 // pred_check_branch
      %58 = sbr.rel (0) target = $region21
    $region20: #{tpu_custom_call.1} parent=1 // pred_region
      %60 = dma.done [#allocation6], 512
    $region21: #{tpu_custom_call.1} parent=1 // pred_fallthru
      _
    // Predicated region
    $region22: #{tpu_custom_call.1} parent=1 // pred_check
      _
    $region23: #{tpu_custom_call.1} parent=1 // pred_check_branch
      %62 = sbr.rel (0) target = $region25
    $region24: #{tpu_custom_call.1} parent=1 // pred_region
      %64 = dma.done [#allocation6], 512
    $region25: #{tpu_custom_call.1} parent=1 // pred_fallthru
      _
    %v65 = vld [vmem:[#allocation2] sm:$0xff]
    %v66 = vld [vmem:[#allocation2 + $0x8] sm:$0xff]
    %v67 = vld [vmem:[#allocation2 + $0x10] sm:$0xff]
    %v68 = vld [vmem:[#allocation2 + $0x18] sm:$0xff]
    %v69 = vmul.f32 %v65, 0.17677669
    %v70 = vmul.f32 %v66, 0.17677669
    %v71 = vmul.f32 %v67, 0.17677669
    %v72 = vmul.f32 %v68, 0.17677669
    %v73 = vld [vmem:[#allocation5] sm:$0xff]
    %v74 = vld [vmem:[#allocation5 + $0x8] sm:$0xff]
    %v75 = vld [vmem:[#allocation5 + $0x10] sm:$0xff]
    %v76 = vld [vmem:[#allocation5 + $0x18] sm:$0xff]
    %vm77 = vcmask 261120
    %v79 = vsel %vm77, %v69, 0
    %v82 = vsel %vm77, %v73, 0
    %84 = vmatpush.xpose.msra.mxu0 0.0
    %85 = vmatpush.xpose.msra.mxu0 0.0
    %86 = vmatpush.xpose.msra.mxu0 0.0
    %87 = vmatpush.xpose.msra.mxu0 0.0
    %88 = vmatpush.xpose.msra.mxu0 0.0
    %89 = vmatpush.xpose.msra.mxu0 0.0
    %90 = vmatpush.xpose.msra.mxu0 0.0
    %91 = vmatpush.xpose.msra.mxu0 0.0
    %92 = vmatpush.xpose.msra.mxu0 0.0
    %93 = vmatpush.xpose.msra.mxu0 0.0
    %94 = vmatpush.xpose.msra.mxu0 0.0
    %95 = vmatpush.xpose.msra.mxu0 0.0
    %96 = vmatpush.xpose.msra.mxu0 0.0
    %97 = vmatpush.xpose.msra.mxu0 0.0
    %98 = vmatpush.xpose.msra.mxu0 0.0
    %99 = vmatpush.xpose.msra.mxu0 %v82
    %100 = vmatmul.f32.gmra.mxu0 %v79
    %v101 = vpop.f32.mrf.mxu0
    %v102 = vadd.f32 0.0, %v101
    %103 = vdwg.mxu0
    %v105 = vsel %vm77, %v70, 0
    %v108 = vsel %vm77, %v74, 0
    %110 = vmatpush.xpose.msra.mxu0 0.0
    %111 = vmatpush.xpose.msra.mxu0 0.0
    %112 = vmatpush.xpose.msra.mxu0 0.0
    %113 = vmatpush.xpose.msra.mxu0 0.0
    %114 = vmatpush.xpose.msra.mxu0 0.0
    %115 = vmatpush.xpose.msra.mxu0 0.0
    %116 = vmatpush.xpose.msra.mxu0 0.0
    %117 = vmatpush.xpose.msra.mxu0 0.0
    %118 = vmatpush.xpose.msra.mxu0 0.0
    %119 = vmatpush.xpose.msra.mxu0 0.0
    %120 = vmatpush.xpose.msra.mxu0 0.0
    %121 = vmatpush.xpose.msra.mxu0 0.0
    %122 = vmatpush.xpose.msra.mxu0 0.0
    %123 = vmatpush.xpose.msra.mxu0 0.0
    %124 = vmatpush.xpose.msra.mxu0 0.0
    %125 = vmatpush.xpose.msra.mxu0 %v108
    %126 = vmatmul.f32.gmra.mxu0 %v105
    %v127 = vpop.f32.mrf.mxu0
    %v128 = vadd.f32 0.0, %v127
    %129 = vdwg.mxu0
    %v131 = vsel %vm77, %v71, 0
    %v134 = vsel %vm77, %v75, 0
    %136 = vmatpush.xpose.msra.mxu0 0.0
    %137 = vmatpush.xpose.msra.mxu0 0.0
    %138 = vmatpush.xpose.msra.mxu0 0.0
    %139 = vmatpush.xpose.msra.mxu0 0.0
    %140 = vmatpush.xpose.msra.mxu0 0.0
    %141 = vmatpush.xpose.msra.mxu0 0.0
    %142 = vmatpush.xpose.msra.mxu0 0.0
    %143 = vmatpush.xpose.msra.mxu0 0.0
    %144 = vmatpush.xpose.msra.mxu0 0.0
    %145 = vmatpush.xpose.msra.mxu0 0.0
    %146 = vmatpush.xpose.msra.mxu0 0.0
    %147 = vmatpush.xpose.msra.mxu0 0.0
    %148 = vmatpush.xpose.msra.mxu0 0.0
    %149 = vmatpush.xpose.msra.mxu0 0.0
    %150 = vmatpush.xpose.msra.mxu0 0.0
    %151 = vmatpush.xpose.msra.mxu0 %v134
    %152 = vmatmul.f32.gmra.mxu0 %v131
    %v153 = vpop.f32.mrf.mxu0
    %v154 = vadd.f32 0.0, %v153
    %155 = vdwg.mxu0
    %v157 = vsel %vm77, %v72, 0
    %v160 = vsel %vm77, %v76, 0
    %162 = vmatpush.xpose.msra.mxu0 0.0
    %163 = vmatpush.xpose.msra.mxu0 0.0
    %164 = vmatpush.xpose.msra.mxu0 0.0
    %165 = vmatpush.xpose.msra.mxu0 0.0
    %166 = vmatpush.xpose.msra.mxu0 0.0
    %167 = vmatpush.xpose.msra.mxu0 0.0
    %168 = vmatpush.xpose.msra.mxu0 0.0
    %169 = vmatpush.xpose.msra.mxu0 0.0
    %170 = vmatpush.xpose.msra.mxu0 0.0
    %171 = vmatpush.xpose.msra.mxu0 0.0
    %172 = vmatpush.xpose.msra.mxu0 0.0
    %173 = vmatpush.xpose.msra.mxu0 0.0
    %174 = vmatpush.xpose.msra.mxu0 0.0
    %175 = vmatpush.xpose.msra.mxu0 0.0
    %176 = vmatpush.xpose.msra.mxu0 0.0
    %177 = vmatpush.xpose.msra.mxu0 %v160
    %178 = vmatmul.f32.gmra.mxu0 %v157
    %v179 = vpop.f32.mrf.mxu0
    %v180 = vadd.f32 0.0, %v179
    %181 = vdwg.mxu0
    %v182 = vld [vmem:[#allocation7] sm:$0xff]
    %v183 = vld [vmem:[#allocation7 + $0x8] sm:$0xff]
    %v184 = vld [vmem:[#allocation7 + $0x10] sm:$0xff]
    %v185 = vld [vmem:[#allocation7 + $0x18] sm:$0xff]
    %vm186 = vcmask 64512
    %v187 = vsel %vm186, %v102, -inf
    %188 = vmax.xlane.f32.xlu0 %v187
    %v189 = vpop.xlane.xlu0 %188
    %v190 = vsel %vm186, %v128, -inf
    %191 = vmax.xlane.f32.xlu0 %v190
    %v192 = vpop.xlane.xlu0 %191
    %v193 = vsel %vm186, %v154, -inf
    %194 = vmax.xlane.f32.xlu0 %v193
    %v195 = vpop.xlane.xlu0 %194
    %v196 = vsel %vm186, %v180, -inf
    %197 = vmax.xlane.f32.xlu0 %v196
    %v198 = vpop.xlane.xlu0 %197
    %v199 = vsub.f32 %v102, %v189
    %v200 = vsub.f32 %v128, %v192
    %v201 = vsub.f32 %v154, %v195
    %v202 = vsub.f32 %v180, %v198
    %v203 = vmul.f32 %v199, 1.442695
    %v204 = vpow.pop %v203
    %v205 = vmul.f32 %v200, 1.442695
    %v206 = vpow.pop %v205
    %v207 = vmul.f32 %v201, 1.442695
    %v208 = vpow.pop %v207
    %v209 = vmul.f32 %v202, 1.442695
    %v210 = vpow.pop %v209
    %v211 = vsel %vm186, %v204, 0.0
    %212 = vadd.xlane.f32.xlu0 %v211
    %v213 = vpop.xlane.xlu0 %212
    %v214 = vsel %vm186, %v206, 0.0
    %215 = vadd.xlane.f32.xlu0 %v214
    %v216 = vpop.xlane.xlu0 %215
    %v217 = vsel %vm186, %v208, 0.0
    %218 = vadd.xlane.f32.xlu0 %v217
    %v219 = vpop.xlane.xlu0 %218
    %v220 = vsel %vm186, %v210, 0.0
    %221 = vadd.xlane.f32.xlu0 %v220
    %v222 = vpop.xlane.xlu0 %221
    %v223 = vrcp.pop %v213
    %v224 = vrcp.pop %v216
    %v225 = vrcp.pop %v219
    %v226 = vrcp.pop %v222
    %v227 = vmul.f32 %v204, %v223
    %v228 = vmul.f32 %v206, %v224
    %v229 = vmul.f32 %v208, %v225
    %v230 = vmul.f32 %v210, %v226
    %231 = vst.msk [vmem:[#allocation9] sm:$0xff] %vm186, %v227
    %232 = vst.msk [vmem:[#allocation9 + $0x8] sm:$0xff] %vm186, %v228
    %233 = vst.msk [vmem:[#allocation9 + $0x10] sm:$0xff] %vm186, %v229
    %234 = vst.msk [vmem:[#allocation9 + $0x18] sm:$0xff] %vm186, %v230
    %v236 = vsel %vm186, %v227, 0
    %238 = vmatpush.msra.mxu0 0.0
    %239 = vmatpush.msra.mxu0 0.0
    %240 = vmatpush.msra.mxu0 0.0
    %241 = vmatpush.msra.mxu0 0.0
    %242 = vmatpush.msra.mxu0 0.0
    %243 = vmatpush.msra.mxu0 0.0
    %244 = vmatpush.msra.mxu0 0.0
    %245 = vmatpush.msra.mxu0 0.0
    %246 = vmatpush.msra.mxu0 0.0
    %247 = vmatpush.msra.mxu0 0.0
    %248 = vmatpush.msra.mxu0 0.0
    %249 = vmatpush.msra.mxu0 0.0
    %250 = vmatpush.msra.mxu0 0.0
    %251 = vmatpush.msra.mxu0 0.0
    %252 = vmatpush.msra.mxu0 0.0
    %253 = vmatpush.msra.mxu0 %v182
    %254 = vmatmul.f32.gmra.mxu0 %v236
    %v255 = vpop.f32.mrf.mxu0
    %v256 = vadd.f32 0.0, %v255
    %257 = vdwg.mxu0
    %v259 = vsel %vm186, %v228, 0
    %261 = vmatpush.msra.mxu0 0.0
    %262 = vmatpush.msra.mxu0 0.0
    %263 = vmatpush.msra.mxu0 0.0
    %264 = vmatpush.msra.mxu0 0.0
    %265 = vmatpush.msra.mxu0 0.0
    %266 = vmatpush.msra.mxu0 0.0
    %267 = vmatpush.msra.mxu0 0.0
    %268 = vmatpush.msra.mxu0 0.0
    %269 = vmatpush.msra.mxu0 0.0
    %270 = vmatpush.msra.mxu0 0.0
    %271 = vmatpush.msra.mxu0 0.0
    %272 = vmatpush.msra.mxu0 0.0
    %273 = vmatpush.msra.mxu0 0.0
    %274 = vmatpush.msra.mxu0 0.0
    %275 = vmatpush.msra.mxu0 0.0
    %276 = vmatpush.msra.mxu0 %v183
    %277 = vmatmul.f32.gmra.mxu0 %v259
    %v278 = vpop.f32.mrf.mxu0
    %v279 = vadd.f32 0.0, %v278
    %280 = vdwg.mxu0
    %v282 = vsel %vm186, %v229, 0
    %284 = vmatpush.msra.mxu0 0.0
    %285 = vmatpush.msra.mxu0 0.0
    %286 = vmatpush.msra.mxu0 0.0
    %287 = vmatpush.msra.mxu0 0.0
    %288 = vmatpush.msra.mxu0 0.0
    %289 = vmatpush.msra.mxu0 0.0
    %290 = vmatpush.msra.mxu0 0.0
    %291 = vmatpush.msra.mxu0 0.0
    %292 = vmatpush.msra.mxu0 0.0
    %293 = vmatpush.msra.mxu0 0.0
    %294 = vmatpush.msra.mxu0 0.0
    %295 = vmatpush.msra.mxu0 0.0
    %296 = vmatpush.msra.mxu0 0.0
    %297 = vmatpush.msra.mxu0 0.0
    %298 = vmatpush.msra.mxu0 0.0
    %299 = vmatpush.msra.mxu0 %v184
    %300 = vmatmul.f32.gmra.mxu0 %v282
    %v301 = vpop.f32.mrf.mxu0
    %v302 = vadd.f32 0.0, %v301
    %303 = vdwg.mxu0
    %v305 = vsel %vm186, %v230, 0
    %307 = vmatpush.msra.mxu0 0.0
    %308 = vmatpush.msra.mxu0 0.0
    %309 = vmatpush.msra.mxu0 0.0
    %310 = vmatpush.msra.mxu0 0.0
    %311 = vmatpush.msra.mxu0 0.0
    %312 = vmatpush.msra.mxu0 0.0
    %313 = vmatpush.msra.mxu0 0.0
    %314 = vmatpush.msra.mxu0 0.0
    %315 = vmatpush.msra.mxu0 0.0
    %316 = vmatpush.msra.mxu0 0.0
    %317 = vmatpush.msra.mxu0 0.0
    %318 = vmatpush.msra.mxu0 0.0
    %319 = vmatpush.msra.mxu0 0.0
    %320 = vmatpush.msra.mxu0 0.0
    %321 = vmatpush.msra.mxu0 0.0
    %322 = vmatpush.msra.mxu0 %v185
    %323 = vmatmul.f32.gmra.mxu0 %v305
    %v324 = vpop.f32.mrf.mxu0
    %v325 = vadd.f32 0.0, %v324
    %326 = vdwg.mxu0
    %327 = vst.msk [vmem:[#allocation8] sm:$0xff] %vm77, %v256
    %328 = vst.msk [vmem:[#allocation8 + $0x8] sm:$0xff] %vm77, %v279
    %329 = vst.msk [vmem:[#allocation8 + $0x10] sm:$0xff] %vm77, %v302
    %330 = vst.msk [vmem:[#allocation8 + $0x18] sm:$0xff] %vm77, %v325
    // Predicated region
    $region26: #{tpu_custom_call.1} parent=1 // pred_check
      _
    $region27: #{tpu_custom_call.1} parent=1 // pred_check_branch
      %332 = sbr.rel (0) target = $region29
    $region28: #{tpu_custom_call.1} parent=1 // pred_region
      %334 = vsyncadd [#allocation4], 0
      %s335 = sshll.u32 [#allocation8], 4
      %s336 = int_to_ptr.vmem [resolvable:$true] %s335
      %s337 = sshll.u32 %s3, 4
      %s338 = int_to_ptr.hbm [resolvable:$true] %s337
      %343 = dma.vmem_to_hbm [thread:$0]  %s336, 512, %s338, [#allocation4], 128, 128, 8
    $region29: #{tpu_custom_call.1} parent=1 // pred_fallthru
      _
    // Predicated region
    $region30: #{tpu_custom_call.1} parent=1 // pred_check
      _
    $region31: #{tpu_custom_call.1} parent=1 // pred_check_branch
      %345 = sbr.rel (0) target = $region33
    $region32: #{tpu_custom_call.1} parent=1 // pred_region
      %347 = vsyncadd [#allocation10], 0
      %s348 = sshll.u32 [#allocation9], 4
      %s349 = int_to_ptr.vmem [resolvable:$true] %s348
      %s350 = sshll.u32 %s4, 4
      %s351 = int_to_ptr.hbm [resolvable:$true] %s350
      %356 = dma.vmem_to_hbm [thread:$0]  %s349, 512, %s351, [#allocation10], 128, 128, 8
    $region33: #{tpu_custom_call.1} parent=1 // pred_fallthru
      _
    // Predicated region
    $region34: #{tpu_custom_call.1} parent=1 // pred_check
      _
    $region35: #{tpu_custom_call.1} parent=1 // pred_check_branch
      %358 = sbr.rel (0) target = $region37
    $region36: #{tpu_custom_call.1} parent=1 // pred_region
      %360 = dma.done [#allocation4], 512
    $region37: #{tpu_custom_call.1} parent=1 // pred_fallthru
      _
    // Predicated region
    $region38: #{tpu_custom_call.1} parent=1 // pred_check
      _
    $region39: #{tpu_custom_call.1} parent=1 // pred_check_branch
      %362 = sbr.rel (0) target = $region41
    $region40: #{tpu_custom_call.1} parent=1 // pred_region
      %364 = dma.done [#allocation10], 512
    $region41: #{tpu_custom_call.1} parent=1 // pred_fallthru
      _
    %365 = vsyncpa [#allocation3], 1
    %366 = vsyncpa [#allocation6], 1
    %367 = vsyncpa [#allocation4], 1
    %368 = vsyncpa [#allocation10], 1

</llo_original>
